<compile_context>
chip_gen: v6e
topology: v6e:2x2x1
jax: 0.10.0
libtpu: 0.0.40
codegen_flags: <defaults>
</compile_context>

<pallas_src>
import jax
import jax.numpy as jnp
from jax.experimental import pallas as pl
from jax.experimental.pallas import tpu as pltpu

IN_F = 10      # layer1 in_features
HID_F = 20     # layer1 out / layer2 in
OUT_F = 30     # layer2 out_features


def _round_up(n, m):
    return ((n + m - 1) // m) * m


def fused_mlp_kernel(x_ref, w_ref, b_ref, o_ref):
    # Single fused matmul: x [tb, 10] @ W [10, 30] + b [1, 30]
    y = jnp.dot(x_ref[...], w_ref[...], preferred_element_type=jnp.float32)
    o_ref[...] = (y + b_ref[...]).astype(o_ref.dtype)


def mlp_forward(x, w1, b1, w2, b2, *, tile_b=8192):
    """x: [B, 10]; w1: [20, 10]; b1: [20]; w2: [30, 20]; b2: [30] (PyTorch conv.)."""
    B, K = x.shape
    assert K == IN_F

    # --- exact algebraic fusion of the two linears (no activation between) ---
    w_fused = (w1.T @ w2.T).astype(jnp.float32)                  # [10, 30]
    b_fused = (b1 @ w2.T + b2).reshape(1, OUT_F).astype(jnp.float32)  # [1, 30]

    # --- batch tiling: tb rows per grid step, multiple of 8, no input padding ---
    tb = max(8, _round_up(min(tile_b, B), 8))
    grid = (pl.cdiv(B, tb),)

    out = pl.pallas_call(
        fused_mlp_kernel,
        out_shape=jax.ShapeDtypeStruct((B, OUT_F), jnp.float32),
        grid=grid,
        in_specs=[
            pl.BlockSpec((tb, IN_F), lambda i: (i, 0)),       # x tile
            pl.BlockSpec((IN_F, OUT_F), lambda i: (0, 0)),    # fused W (resident)
            pl.BlockSpec((1, OUT_F), lambda i: (0, 0)),       # fused bias (resident)
        ],
        out_specs=pl.BlockSpec((tb, OUT_F), lambda i: (i, 0)),
        compiler_params=pltpu.CompilerParams(
            dimension_semantics=("parallel",),                # megacore on v7x
            vmem_limit_bytes=32 * 1024 * 1024,                # safe on v5e/v6e/v7x
        ),
    )(x, w_fused, b_fused)

    return out


def init_params(key):
    """Deterministic init mimicking nn.Linear default (uniform +/- 1/sqrt(fan_in))."""
    k1, k2, k3, k4 = jax.random.split(key, 4)
    bound1 = 1.0 / jnp.sqrt(float(IN_F))
    bound2 = 1.0 / jnp.sqrt(float(HID_F))
    w1 = jax.random.uniform(k1, (HID_F, IN_F), jnp.float32, -bound1, bound1)
    b1 = jax.random.uniform(k2, (HID_F,), jnp.float32, -bound1, bound1)
    w2 = jax.random.uniform(k3, (OUT_F, HID_F), jnp.float32, -bound2, bound2)
    b2 = jax.random.uniform(k4, (OUT_F,), jnp.float32, -bound2, bound2)
    return w1, b1, w2, b2


if __name__ == "__main__":
    key = jax.random.PRNGKey(0)
    k_x, k_p = jax.random.split(key)

    w1, b1, w2, b2 = init_params(k_p)

    # Small aligned case.
    B = 8
    x = jax.random.normal(k_x, (B, IN_F), jnp.float32)
    out = jax.block_until_ready(mlp_forward(x, w1, b1, w2, b2))
    ref = (x @ w1.T + b1) @ w2.T + b2
    assert out.shape == (B, OUT_F)
    assert jnp.allclose(out, ref, atol=1e-5, rtol=1e-5)

    # Boundary-block case (B not a multiple of the sublane tile): exercises
    # Pallas' masked reads/writes on the partial block.
    B2 = 13
    x2 = jax.random.normal(jax.random.PRNGKey(1), (B2, IN_F), jnp.float32)
    out2 = jax.block_until_ready(mlp_forward(x2, w1, b1, w2, b2))
    ref2 = (x2 @ w1.T + b1) @ w2.T + b2
    assert out2.shape == (B2, OUT_F)
    assert jnp.allclose(out2, ref2, atol=1e-5, rtol=1e-5)

    print("KERNEL_OK")
</pallas_src>

<mosaic_0001>
module attributes {stable_mosaic.version = 11 : i64} {
  func.func @fused_mlp_kernel(%arg0: i32, %arg1: memref<8x10xf32, #tpu.memory_space<vmem>>, %arg2: memref<10x30xf32, #tpu.memory_space<vmem>>, %arg3: memref<1x30xf32, #tpu.memory_space<vmem>>, %arg4: memref<8x30xf32, #tpu.memory_space<vmem>>) attributes {dimension_semantics = [#tpu.dimension_semantics<parallel>], iteration_bounds = array<i64: 1>, scalar_prefetch = 0 : i64, scratch_operands = 0 : i64, tpu.core_type = #tpu.core_type<tc>, window_params = [{transform_indices = @transform_0, window_bounds = array<i64: 8, 10>}, {pipeline_mode = #tpu.pipeline_mode<synchronous>, transform_indices = @transform_1, window_bounds = array<i64: 10, 30>}, {pipeline_mode = #tpu.pipeline_mode<synchronous>, transform_indices = @transform_2, window_bounds = array<i64: 1, 30>}, {transform_indices = @transform_3, window_bounds = array<i64: 8, 30>}]} {
    %c0 = arith.constant 0 : index
    %c0_0 = arith.constant 0 : index
    %0 = vector.load %arg1[%c0, %c0_0] : memref<8x10xf32, #tpu.memory_space<vmem>>, vector<8x10xf32>
    %c0_1 = arith.constant 0 : index
    %c0_2 = arith.constant 0 : index
    %1 = vector.load %arg2[%c0_1, %c0_2] : memref<10x30xf32, #tpu.memory_space<vmem>>, vector<10x30xf32>
    %cst = arith.constant dense<0.000000e+00> : vector<8x30xf32>
    %2 = tpu.matmul %0, %1, %cst {dimension_numbers = #tpu.dot_dimension_numbers<[1], [0], [0], [1], [0, 0, 1, 1], [], []>} : vector<8x10xf32>, vector<10x30xf32>, vector<8x30xf32> -> vector<8x30xf32>
    %c0_3 = arith.constant 0 : index
    %c0_4 = arith.constant 0 : index
    %3 = vector.load %arg3[%c0_3, %c0_4] : memref<1x30xf32, #tpu.memory_space<vmem>>, vector<1x30xf32>
    %4 = vector.broadcast %3 : vector<1x30xf32> to vector<8x30xf32>
    %5 = arith.addf %2, %4 : vector<8x30xf32>
    %c0_5 = arith.constant 0 : index
    %c0_6 = arith.constant 0 : index
    %6 = vector.load %arg4[%c0_5, %c0_6] : memref<8x30xf32, #tpu.memory_space<vmem>>, vector<8x30xf32>
    tpu.vector_store %arg4[%c0_5, %c0_6], %5 {strides = array<i32>} : memref<8x30xf32, #tpu.memory_space<vmem>>, vector<8x30xf32>,
    return
  }
  func.func @transform_0(%arg0: i32) -> (i32, i32) {
    %c0_i32 = arith.constant 0 : i32
    %c0_i32_0 = arith.constant 0 : i32
    return %arg0, %c0_i32 : i32, i32
  }
  func.func @transform_1(%arg0: i32) -> (i32, i32) {
    %c0_i32 = arith.constant 0 : i32
    %c0_i32_0 = arith.constant 0 : i32
    %c0_i32_1 = arith.constant 0 : i32
    return %c0_i32, %c0_i32_0 : i32, i32
  }
  func.func @transform_2(%arg0: i32) -> (i32, i32) {
    %c0_i32 = arith.constant 0 : i32
    %c0_i32_0 = arith.constant 0 : i32
    %c0_i32_1 = arith.constant 0 : i32
    return %c0_i32, %c0_i32_0 : i32, i32
  }
  func.func @transform_3(%arg0: i32) -> (i32, i32) {
    %c0_i32 = arith.constant 0 : i32
    %c0_i32_0 = arith.constant 0 : i32
    return %arg0, %c0_i32 : i32, i32
  }
}

</mosaic_0001>

<llo_original>
// kernel: tpu_custom_call.1
$region0: #{tpu_custom_call.1}
  #allocation0 [shape = 'u32[]', space=smem, size = 0x4, offset = 0x4, fixed_abs, tag = 'smem constant byte address 0x4 - core index']
  #allocation1 [shape = 'u32[144,128]{1,0:T(1,128)}', space=vmem, size = 0x12000, scoped, tag = 'internal scratch']
  %s0 = inlined_call_operand.hbm [shape: f32[8,10], index: 0, kind: input, shape index: {}]
  %s1 = inlined_call_operand.hbm [shape: f32[10,30], index: 1, kind: input, shape index: {}]
  %s2 = inlined_call_operand.vmem [shape: f32[1,30], index: 2, kind: input, shape index: {}]
  %s3 = inlined_call_operand.hbm [shape: f32[8,30], index: 3, kind: output, shape index: {}]
  %s4 = sld [smem:[#allocation0]]
  $region30: #{tpu_custom_call.1} parent=0
    _
  %s6 = ssub.s32 1, %s4
  %s7 = scalar_select 0, %s6, %s4
  $region1: #{tpu_custom_call.1} parent=0
    #allocation2 [shape = 'u8[4096]{0}', space=vmem, size = 0x1000, scoped, tag = 'input window, operand 0, single buffered']
    #allocation3 [shape = 's32[1]{0}', space=sflag, size = 0x4, scoped, tag = 'scoped memory for tpu_custom_call.1']
    #allocation4 [shape = 's32[1]{0}', space=sflag, size = 0x4, scoped, tag = 'scoped memory for tpu_custom_call.1']
    #allocation5 [shape = 'u8[8192]{0}', space=vmem, size = 0x2000, scoped, tag = 'input window, operand 1, single buffered']
    #allocation6 [shape = 's32[1]{0}', space=sflag, size = 0x4, scoped, tag = 'scoped memory for tpu_custom_call.1']
    #allocation7 [shape = 'u8[4096]{0}', space=vmem, size = 0x1000, scoped, tag = 'output window, operand 0, single buffered']
    %8 = vsyncpa [#allocation3], 0
    %9 = vsyncpa [#allocation6], 0
    %10 = vsyncpa [#allocation4], 0
    // Predicated region
    $region2: #{tpu_custom_call.1} parent=1 // pred_check
      _
    $region3: #{tpu_custom_call.1} parent=1 // pred_check_branch
      %12 = sbr.rel (0) target = $region5
    $region4: #{tpu_custom_call.1} parent=1 // pred_region
      %s14 = ssub.s32 128, 128
      %15 = vsyncadd [#allocation3], %s14
      %s17 = sshll.u32 [#allocation2], 4
      %s18 = int_to_ptr.vmem [resolvable:$true] %s17
      %20 = dma.hbm_to_vmem [thread:$0]  %s0, 128, %s18, [#allocation3]
    $region5: #{tpu_custom_call.1} parent=1 // pred_fallthru
      _
    // Predicated region
    $region6: #{tpu_custom_call.1} parent=1 // pred_check
      _
    $region7: #{tpu_custom_call.1} parent=1 // pred_check_branch
      %22 = sbr.rel (0) target = $region9
    $region8: #{tpu_custom_call.1} parent=1 // pred_region
      %s24 = ssub.s32 256, 256
      %25 = vsyncadd [#allocation6], %s24
      %s26 = sshll.u32 [#allocation5], 4
      %s27 = int_to_ptr.vmem [resolvable:$true] %s26
      %32 = dma.hbm_to_vmem [thread:$0]  %s1, 256, %s27, [#allocation6], 128, 128, 8
    $region9: #{tpu_custom_call.1} parent=1 // pred_fallthru
      _
    // Predicated region
    $region10: #{tpu_custom_call.1} parent=1 // pred_check
      _
    $region11: #{tpu_custom_call.1} parent=1 // pred_check_branch
      %34 = sbr.rel (0) target = $region13
    $region12: #{tpu_custom_call.1} parent=1 // pred_region
      _
    $region13: #{tpu_custom_call.1} parent=1 // pred_fallthru
      _
    // Predicated region
    $region14: #{tpu_custom_call.1} parent=1 // pred_check
      _
    $region15: #{tpu_custom_call.1} parent=1 // pred_check_branch
      %36 = sbr.rel (0) target = $region17
    $region16: #{tpu_custom_call.1} parent=1 // pred_region
      %37 = dma.done [#allocation3], 128
    $region17: #{tpu_custom_call.1} parent=1 // pred_fallthru
      _
    // Predicated region
    $region18: #{tpu_custom_call.1} parent=1 // pred_check
      _
    $region19: #{tpu_custom_call.1} parent=1 // pred_check_branch
      %39 = sbr.rel (0) target = $region21
    $region20: #{tpu_custom_call.1} parent=1 // pred_region
      %40 = dma.done [#allocation6], 256
    $region21: #{tpu_custom_call.1} parent=1 // pred_fallthru
      _
    %v41 = vld [vmem:[#allocation2] sm:$0xff]
    %v42 = vld [vmem:[#allocation5] sm:$0xff]
    %v43 = vld [vmem:[#allocation5 + $0x8] sm:$0x3]
    %v44 = vld [vmem:[%s2] sm:$0x1]
    %v46 = vlaneseq
    %v47 = vshrl.u32 %v46, 7
    %v48 = vsub.s32 0, %v47
    %v49 = vrot.slane %v44, %v48
    %vm51 = vcmask 80896
    %v53 = vsel %vm51, %v41, 0
    %vm55 = vcmask 1041408
    %v57 = vsel %vm55, %v43, 0
    %59 = vmatprep.subr.mxu0 0.0
    %60 = vmatpush1.msra.mxu0 0.0
    %61 = vmatprep.subr.mxu0 0.0
    %62 = vmatpush1.msra.mxu0 0.0
    %63 = vmatprep.subr.mxu0 0.0
    %64 = vmatpush1.msra.mxu0 0.0
    %65 = vmatprep.subr.mxu0 0.0
    %66 = vmatpush1.msra.mxu0 0.0
    %67 = vmatprep.subr.mxu0 0.0
    %68 = vmatpush1.msra.mxu0 0.0
    %69 = vmatprep.subr.mxu0 0.0
    %70 = vmatpush1.msra.mxu0 0.0
    %71 = vmatprep.subr.mxu0 0.0
    %72 = vmatpush1.msra.mxu0 0.0
    %73 = vmatprep.subr.mxu0 0.0
    %74 = vmatpush1.msra.mxu0 0.0
    %75 = vmatprep.subr.mxu0 0.0
    %76 = vmatpush1.msra.mxu0 0.0
    %77 = vmatprep.subr.mxu0 0.0
    %78 = vmatpush1.msra.mxu0 0.0
    %79 = vmatprep.subr.mxu0 0.0
    %80 = vmatpush1.msra.mxu0 0.0
    %81 = vmatprep.subr.mxu0 0.0
    %82 = vmatpush1.msra.mxu0 0.0
    %83 = vmatprep.subr.mxu0 0.0
    %84 = vmatpush1.msra.mxu0 0.0
    %85 = vmatprep.subr.mxu0 0.0
    %86 = vmatpush1.msra.mxu0 0.0
    %87 = vmatprep.subr.mxu0 0.0
    %88 = vmatpush1.msra.mxu0 %v57
    %89 = vmatprep.subr.mxu0 0.0
    %90 = vmatpush1.msra.mxu0 %v42
    %91 = vmatprep.subr.mxu0 0.0
    %92 = vmatpush2.msra.mxu0 0.0
    %93 = vmatprep.subr.mxu0 0.0
    %94 = vmatpush2.msra.mxu0 0.0
    %95 = vmatprep.subr.mxu0 0.0
    %96 = vmatpush2.msra.mxu0 0.0
    %97 = vmatprep.subr.mxu0 0.0
    %98 = vmatpush2.msra.mxu0 0.0
    %99 = vmatprep.subr.mxu0 0.0
    %100 = vmatpush2.msra.mxu0 0.0
    %101 = vmatprep.subr.mxu0 0.0
    %102 = vmatpush2.msra.mxu0 0.0
    %103 = vmatprep.subr.mxu0 0.0
    %104 = vmatpush2.msra.mxu0 0.0
    %105 = vmatprep.subr.mxu0 0.0
    %106 = vmatpush2.msra.mxu0 0.0
    %107 = vmatprep.subr.mxu0 0.0
    %108 = vmatpush2.msra.mxu0 0.0
    %109 = vmatprep.subr.mxu0 0.0
    %110 = vmatpush2.msra.mxu0 0.0
    %111 = vmatprep.subr.mxu0 0.0
    %112 = vmatpush2.msra.mxu0 0.0
    %113 = vmatprep.subr.mxu0 0.0
    %114 = vmatpush2.msra.mxu0 0.0
    %115 = vmatprep.subr.mxu0 0.0
    %116 = vmatpush2.msra.mxu0 0.0
    %117 = vmatprep.subr.mxu0 0.0
    %118 = vmatpush2.msra.mxu0 0.0
    %119 = vmatprep.subr.mxu0 0.0
    %120 = vmatpush2.msra.mxu0 0.0
    %121 = vmatprep.subr.mxu0 0.0
    %122 = vmatpush2.msra.mxu0 0.0
    %123 = vmatprep.mubr.f32.mxu0 0.0
    %124 = vmatmul.mubr.f32.gmra.mxu0 %v53
    %v125 = vpop.f32.mrf.mxu0
    %v126 = vadd.f32 %v49, %v125
    %v127 = vpop.f32.mrf.mxu0
    %128 = vdwg.mxu0
    %vm129 = vcmask 244736
    %130 = vst.msk [vmem:[#allocation7] sm:$0xff] %vm129, %v126
    // Predicated region
    $region22: #{tpu_custom_call.1} parent=1 // pred_check
      _
    $region23: #{tpu_custom_call.1} parent=1 // pred_check_branch
      %132 = sbr.rel (0) target = $region25
    $region24: #{tpu_custom_call.1} parent=1 // pred_region
      %s134 = ssub.s32 128, 128
      %135 = vsyncadd [#allocation4], %s134
      %s137 = sshll.u32 [#allocation7], 4
      %s138 = int_to_ptr.vmem [resolvable:$true] %s137
      %140 = dma.vmem_to_hbm [thread:$0]  %s138, 128, %s3, [#allocation4]
    $region25: #{tpu_custom_call.1} parent=1 // pred_fallthru
      _
    // Predicated region
    $region26: #{tpu_custom_call.1} parent=1 // pred_check
      _
    $region27: #{tpu_custom_call.1} parent=1 // pred_check_branch
      %142 = sbr.rel (0) target = $region29
    $region28: #{tpu_custom_call.1} parent=1 // pred_region
      %143 = dma.done [#allocation4], 128
    $region29: #{tpu_custom_call.1} parent=1 // pred_fallthru
      _
    %144 = vsyncpa [#allocation3], 1
    %145 = vsyncpa [#allocation6], 1
    %146 = vsyncpa [#allocation4], 1

</llo_original>
